<compile_context>
chip_gen: v7x
topology: tpu7x:2x2x1
jax: 0.10.0
libtpu: 0.0.40
codegen_flags: <defaults>
</compile_context>

<pallas_src>
import jax
import jax.numpy as jnp
from jax.experimental import pallas as pl
from jax.experimental.pallas import tpu as pltpu


def _pick_nms_kernel(sel_ref, box_ref, score_ref, out_ref):
    # sel_ref   : [S, 3] int32, SMEM (scalar prefetch)
    # box_ref   : [1, 1, 4]  f32 VMEM  (row selected by the index_map)
    # score_ref : [1, 1, C]  f32 VMEM  (row selected by the index_map)
    # out_ref   : [1, 1, 7]  f32 VMEM
    s = pl.program_id(0)
    b = sel_ref[s, 0]                          # batch index (scalar, SMEM)
    l = sel_ref[s, 1]                          # label index (scalar, SMEM)

    box = box_ref[...]                         # [1, 1, 4]
    scores = score_ref[...]                    # [1, 1, C]
    C = scores.shape[-1]

    # Pick score column `l` with a one-hot mask + lane reduction (C lanes only).
    col = jax.lax.broadcasted_iota(jnp.int32, (1, 1, C), 2)
    score = jnp.sum(jnp.where(col == l, scores, 0.0),
                    axis=-1, keepdims=True)    # [1, 1, 1]

    b_f = jnp.broadcast_to(b.astype(jnp.float32), (1, 1, 1))
    l_f = jnp.broadcast_to(l.astype(jnp.float32), (1, 1, 1))

    # Assemble [batch, x1, y1, x2, y2, score, label] in registers, single store.
    out_ref[...] = jnp.concatenate([b_f, box, score, l_f], axis=-1)  # [1, 1, 7]


def pick_nms_predictions_flat(pred_boxes, pred_scores, selected_indexes):
    """pred_boxes [B,N,4] f32, pred_scores [B,N,C] f32,
    selected_indexes [S,3] int (torch int64 -> int32 for the TPU scalar path)."""
    B, N, _ = pred_boxes.shape
    C = pred_scores.shape[2]
    S = selected_indexes.shape[0]
    assert B * N < 2**31, "flat row index must fit in int32"

    sel_i32 = selected_indexes.astype(jnp.int32)
    # Free layout plumbing in XLA: flatten batch into rows so every kernel block's
    # last two dims equal the full array's last two dims.
    boxes_flat = pred_boxes.astype(jnp.float32).reshape(B * N, 1, 4)
    scores_flat = pred_scores.astype(jnp.float32).reshape(B * N, 1, C)

    def row_map(s, sel_ref):
        # flat row = batch_idx * N + box_idx  (block index: block size 1 on axis 0)
        return (sel_ref[s, 0] * N + sel_ref[s, 2], 0, 0)

    out = pl.pallas_call(
        _pick_nms_kernel,
        out_shape=jax.ShapeDtypeStruct((S, 1, 7), jnp.float32),
        grid_spec=pltpu.PrefetchScalarGridSpec(
            num_scalar_prefetch=1,
            grid=(S,),
            in_specs=[
                pl.BlockSpec((1, 1, 4), row_map),   # one boxes row per step
                pl.BlockSpec((1, 1, C), row_map),   # one scores row per step
            ],
            out_specs=pl.BlockSpec((1, 1, 7), lambda s, sel_ref: (s, 0, 0)),
        ),
        compiler_params=pltpu.CompilerParams(
            dimension_semantics=("parallel",)),      # steps independent; megacore-safe
    )(sel_i32, boxes_flat, scores_flat)
    return out.reshape(S, 7)


def _reference(pred_boxes, pred_scores, selected_indexes):
    b = selected_indexes[:, 0]
    l = selected_indexes[:, 1]
    k = selected_indexes[:, 2]
    boxes = pred_boxes[b, k]                        # [S, 4]
    scores = pred_scores[b, k, l]                   # [S]
    return jnp.concatenate(
        [b[:, None].astype(pred_boxes.dtype),
         boxes,
         scores[:, None],
         l[:, None].astype(pred_boxes.dtype)],
        axis=1,
    )


if __name__ == "__main__":
    # Module configuration (synthetic, small):
    batch_size = 2
    num_pre_nms_predictions = 64          # N
    num_classes = 16                      # C (dynamic axis in the ONNX graph)
    max_predictions_per_image = 32
    S = max_predictions_per_image // 2    # number of selected rows

    key = jax.random.PRNGKey(0)
    kb, ks, k0, k1, k2 = jax.random.split(key, 5)

    pred_boxes = jax.random.uniform(
        kb, (batch_size, num_pre_nms_predictions, 4), dtype=jnp.float32) * 100.0
    pred_scores = jax.random.uniform(
        ks, (batch_size, num_pre_nms_predictions, num_classes), dtype=jnp.float32)

    batch_idx = jax.random.randint(k0, (S,), 0, batch_size, dtype=jnp.int32)
    label_idx = jax.random.randint(k1, (S,), 0, num_classes, dtype=jnp.int32)
    box_idx = jax.random.randint(k2, (S,), 0, num_pre_nms_predictions, dtype=jnp.int32)
    selected_indexes = jnp.stack([batch_idx, label_idx, box_idx], axis=1)  # [S, 3]

    out = pick_nms_predictions_flat(pred_boxes, pred_scores, selected_indexes)
    out = jax.block_until_ready(out)

    ref = _reference(pred_boxes, pred_scores, selected_indexes)
    assert out.shape == (S, 7), out.shape
    assert jnp.allclose(out, ref, atol=1e-5, rtol=1e-5), "mismatch vs reference"

    print("KERNEL_OK")
</pallas_src>

<mosaic_0001>
module attributes {stable_mosaic.version = 11 : i64} {
  func.func @_pick_nms_kernel(%arg0: i32, %arg1: memref<16x3xi32, #tpu.memory_space<smem>>, %arg2: memref<1x1x4xf32, #tpu.memory_space<vmem>>, %arg3: memref<1x1x16xf32, #tpu.memory_space<vmem>>, %arg4: memref<1x1x7xf32, #tpu.memory_space<vmem>>) attributes {dimension_semantics = [#tpu.dimension_semantics<parallel>], iteration_bounds = array<i64: 16>, scalar_prefetch = 1 : i64, scratch_operands = 0 : i64, tpu.core_type = #tpu.core_type<tc>, window_params = [{transform_indices = @transform_0, window_bounds = array<i64: 1, 1, 4>}, {transform_indices = @transform_1, window_bounds = array<i64: 1, 1, 16>}, {transform_indices = @transform_2, window_bounds = array<i64: 1, 1, 7>}]} {
    %0 = arith.index_cast %arg0 : i32 to index
    %c0 = arith.constant 0 : index
    %1 = memref.load %arg1[%0, %c0] : memref<16x3xi32, #tpu.memory_space<smem>>
    %2 = arith.index_cast %arg0 : i32 to index
    %c1 = arith.constant 1 : index
    %3 = memref.load %arg1[%2, %c1] : memref<16x3xi32, #tpu.memory_space<smem>>
    %c0_0 = arith.constant 0 : index
    %c0_1 = arith.constant 0 : index
    %c0_2 = arith.constant 0 : index
    %4 = vector.load %arg2[%c0_0, %c0_1, %c0_2] : memref<1x1x4xf32, #tpu.memory_space<vmem>>, vector<1x1x4xf32>
    %c0_3 = arith.constant 0 : index
    %c0_4 = arith.constant 0 : index
    %c0_5 = arith.constant 0 : index
    %5 = vector.load %arg3[%c0_3, %c0_4, %c0_5] : memref<1x1x16xf32, #tpu.memory_space<vmem>>, vector<1x1x16xf32>
    %6 = tpu.iota {dimensions = array<i32: 2>} : vector<1x1x16xi32>
    %7 = vector.broadcast %3 : i32 to vector<1x1x16xi32>
    %8 = arith.cmpi eq, %6, %7 : vector<1x1x16xi32>
    %cst = arith.constant 0.000000e+00 : f32
    %9 = vector.broadcast %cst : f32 to vector<1x1x16xf32>
    %10 = arith.select %8, %5, %9 : vector<1x1x16xi1>, vector<1x1x16xf32>
    %cst_6 = arith.constant dense<0.000000e+00> : vector<1x1xf32>
    %11 = vector.multi_reduction <add>, %10, %cst_6 [2] : vector<1x1x16xf32> to vector<1x1xf32>
    %12 = vector.shape_cast %11 : vector<1x1xf32> to vector<1x1x1xf32>
    %13 = arith.sitofp %1 : i32 to f32
    %14 = vector.broadcast %13 : f32 to vector<1x1x1xf32>
    %15 = arith.sitofp %3 : i32 to f32
    %16 = vector.broadcast %15 : f32 to vector<1x1x1xf32>
    %17 = tpu.concatenate %14, %4, %12, %16 in 2 : vector<1x1x1xf32>, vector<1x1x4xf32>, vector<1x1x1xf32>, vector<1x1x1xf32> -> vector<1x1x7xf32>
    %c0_7 = arith.constant 0 : index
    %c0_8 = arith.constant 0 : index
    %c0_9 = arith.constant 0 : index
    %18 = vector.load %arg4[%c0_7, %c0_8, %c0_9] : memref<1x1x7xf32, #tpu.memory_space<vmem>>, vector<1x1x7xf32>
    tpu.vector_store %arg4[%c0_7, %c0_8, %c0_9], %17 {strides = array<i32>} : memref<1x1x7xf32, #tpu.memory_space<vmem>>, vector<1x1x7xf32>,
    return
  }
  func.func @transform_0(%arg0: i32, %arg1: memref<16x3xi32, #tpu.memory_space<smem>>) -> (i32, i32, i32) {
    %0 = arith.index_cast %arg0 : i32 to index
    %c0 = arith.constant 0 : index
    %1 = memref.load %arg1[%0, %c0] : memref<16x3xi32, #tpu.memory_space<smem>>
    %c64_i32 = arith.constant 64 : i32
    %2 = arith.muli %1, %c64_i32 : i32
    %3 = arith.index_cast %arg0 : i32 to index
    %c2 = arith.constant 2 : index
    %4 = memref.load %arg1[%3, %c2] : memref<16x3xi32, #tpu.memory_space<smem>>
    %5 = arith.addi %2, %4 : i32
    %c0_i32 = arith.constant 0 : i32
    %c0_i32_0 = arith.constant 0 : i32
    %c0_i32_1 = arith.constant 0 : i32
    return %5, %c0_i32, %c0_i32_0 : i32, i32, i32
  }
  func.func @transform_1(%arg0: i32, %arg1: memref<16x3xi32, #tpu.memory_space<smem>>) -> (i32, i32, i32) {
    %0 = arith.index_cast %arg0 : i32 to index
    %c0 = arith.constant 0 : index
    %1 = memref.load %arg1[%0, %c0] : memref<16x3xi32, #tpu.memory_space<smem>>
    %c64_i32 = arith.constant 64 : i32
    %2 = arith.muli %1, %c64_i32 : i32
    %3 = arith.index_cast %arg0 : i32 to index
    %c2 = arith.constant 2 : index
    %4 = memref.load %arg1[%3, %c2] : memref<16x3xi32, #tpu.memory_space<smem>>
    %5 = arith.addi %2, %4 : i32
    %c0_i32 = arith.constant 0 : i32
    %c0_i32_0 = arith.constant 0 : i32
    %c0_i32_1 = arith.constant 0 : i32
    return %5, %c0_i32, %c0_i32_0 : i32, i32, i32
  }
  func.func @transform_2(%arg0: i32, %arg1: memref<16x3xi32, #tpu.memory_space<smem>>) -> (i32, i32, i32) {
    %c0_i32 = arith.constant 0 : i32
    %c0_i32_0 = arith.constant 0 : i32
    %c0_i32_1 = arith.constant 0 : i32
    return %arg0, %c0_i32, %c0_i32_0 : i32, i32, i32
  }
}

</mosaic_0001>

<llo_original>
// kernel: tpu_custom_call.1
$region0: #{tpu_custom_call.1}
  #allocation0 [shape = 'u32[]', space=smem, size = 0x4, offset = 0x4, fixed_abs, tag = 'smem constant byte address 0x4 - core index']
  #allocation1 [shape = 'u32[144,128]{1,0:T(1,128)}', space=vmem, size = 0x12000, scoped, tag = 'internal scratch']
  #allocation2 [shape = 's32[1]{0}', space=sflag, size = 0x4, scoped, tag = 'scoped memory for tpu_custom_call.1']
  #allocation3 [shape = 'u8[8192]{0}', space=smem, size = 0x2000, scoped, tag = 'prefetched SMEM operand 0']
  %s0 = inlined_call_operand.vmem [shape: s32[16,3], index: 0, kind: input, shape index: {}]
  %s1 = inlined_call_operand.vmem [shape: f32[128,1,4], index: 1, kind: input, shape index: {}]
  %s2 = inlined_call_operand.vmem [shape: f32[128,1,16], index: 2, kind: input, shape index: {}]
  %s3 = inlined_call_operand.vmem [shape: f32[16,1,7], index: 3, kind: output, shape index: {}]
  %s4 = sld [smem:[#allocation0]]
  $region41: #{tpu_custom_call.1} parent=0
    _
  %s6 = ssub.s32 1, %s4
  %s7 = scalar_select 0, %s6, %s4
  %s8 = sshll.u32 %s0, 4
  %s9 = int_to_ptr.vmem [resolvable:$true] %s8
  %11 = dma.vmem_to_smem %s9, 256, [#allocation3], [#allocation2]
  %12 = dma.done [#allocation2], 256
  %13 = sfence
  loop: start=0, step=1, limit=18
  $region2: #{tpu_custom_call.1} parent=0 // loop_pre_header
    _
  $region3: #{tpu_custom_call.1} parent=0 // loop_header
    %s15 = sphi 0, %s19
    %p16 = scmp.ge.s32.totalorder %s15, 18
    %s37 = sphi 0, %s39
    %s40 = sphi 0, %s37
    %s41 = sphi 0, %s40
    %s57 = sphi 0, %s41
    %s75 = sphi 0, %s77
    %s78 = sphi 0, %s75
    %s79 = sphi 0, %s78
    %s95 = sphi 0, %s79
    %s101 = sphi 0, %s103
    %s104 = sphi 0, %s101
    %s105 = sphi 0, %s104
    %s121 = sphi 0, %s105
  $region4: #{tpu_custom_call.1} parent=0 // loop_header_branch
    %18 = sbr.rel (%p16) target = $region8
  $region5: #{tpu_custom_call.1} parent=0 // loop_body
    %s20 = ssub.s32 %s15, 1
    %s21 = ssub.s32 %s15, 2
    %s22 = sadd.s32 %s15, 1
    %s23 = smul.u32 %s15, 128
    %s24 = sld [smem:[#allocation3 + %s23]]
    %s25 = smul.u32 %s24, 64
    %s26 = sadd.s32 %s23, 2
    %s27 = sld [smem:[#allocation3 + %s26]]
    %s28 = sadd.s32 %s25, %s27
    %s29 = smul.u32 %s22, 128
    %s30 = sld [smem:[#allocation3 + %s29]]
    %s31 = smul.u32 %s30, 64
    %s32 = sadd.s32 %s29, 2
    %s33 = sld [smem:[#allocation3 + %s32]]
    %s34 = sadd.s32 %s31, %s33
    %s35 = ssub.s32 %s28, %s34
    %p36 = scmp.eq.s32.totalorder %s35, 0
    %s38 = sadd.s32 %s37, 1
    %s39 = scalar_select %p36, %s37, %s38
    %p42 = pneg %p36
    %p43 = scmp.eq.s32.totalorder %s15, 15
    %p44 = por %p42, %p43
    %p45 = scmp.ne.s32.totalorder %s37, %s40
    %p46 = scmp.eq.s32.totalorder %s15, 0
    %p47 = por %p45, %p46
    %p48 = scmp.ne.s32.totalorder %s37, %s40
    %p49 = scmp.eq.s32.totalorder %s20, 15
    %p50 = por %p48, %p49
    %p51 = scmp.ne.s32.totalorder %s40, %s41
    %p52 = scmp.eq.s32.totalorder %s20, 0
    %p53 = por %p51, %p52
    %p54 = scmp.ne.s32.totalorder %s40, %s41
    %p55 = scmp.eq.s32.totalorder %s21, 15
    %p56 = por %p54, %p55
    %p58 = scmp.ne.s32.totalorder %s41, %s57
    %p59 = scmp.eq.s32.totalorder %s21, 0
    %p60 = por %p58, %p59
    %s61 = smul.u32 %s15, 128
    %s62 = sld [smem:[#allocation3 + %s61]]
    %s63 = smul.u32 %s62, 64
    %s64 = sadd.s32 %s61, 2
    %s65 = sld [smem:[#allocation3 + %s64]]
    %s66 = sadd.s32 %s63, %s65
    %s67 = smul.u32 %s22, 128
    %s68 = sld [smem:[#allocation3 + %s67]]
    %s69 = smul.u32 %s68, 64
    %s70 = sadd.s32 %s67, 2
    %s71 = sld [smem:[#allocation3 + %s70]]
    %s72 = sadd.s32 %s69, %s71
    %s73 = ssub.s32 %s66, %s72
    %p74 = scmp.eq.s32.totalorder %s73, 0
    %s76 = sadd.s32 %s75, 1
    %s77 = scalar_select %p74, %s75, %s76
    %p80 = pneg %p74
    %p81 = scmp.eq.s32.totalorder %s15, 15
    %p82 = por %p80, %p81
    %p83 = scmp.ne.s32.totalorder %s75, %s78
    %p84 = scmp.eq.s32.totalorder %s15, 0
    %p85 = por %p83, %p84
    %p86 = scmp.ne.s32.totalorder %s75, %s78
    %p87 = scmp.eq.s32.totalorder %s20, 15
    %p88 = por %p86, %p87
    %p89 = scmp.ne.s32.totalorder %s78, %s79
    %p90 = scmp.eq.s32.totalorder %s20, 0
    %p91 = por %p89, %p90
    %p92 = scmp.ne.s32.totalorder %s78, %s79
    %p93 = scmp.eq.s32.totalorder %s21, 15
    %p94 = por %p92, %p93
    %p96 = scmp.ne.s32.totalorder %s79, %s95
    %p97 = scmp.eq.s32.totalorder %s21, 0
    %p98 = por %p96, %p97
    %s99 = ssub.s32 %s15, %s22
    %p100 = scmp.eq.s32.totalorder %s99, 0
    %s102 = sadd.s32 %s101, 1
    %s103 = scalar_select %p100, %s101, %s102
    %p106 = pneg %p100
    %p107 = scmp.eq.s32.totalorder %s15, 15
    %p108 = por %p106, %p107
    %p109 = scmp.ne.s32.totalorder %s101, %s104
    %p110 = scmp.eq.s32.totalorder %s15, 0
    %p111 = por %p109, %p110
    %p112 = scmp.ne.s32.totalorder %s101, %s104
    %p113 = scmp.eq.s32.totalorder %s20, 15
    %p114 = por %p112, %p113
    %p115 = scmp.ne.s32.totalorder %s104, %s105
    %p116 = scmp.eq.s32.totalorder %s20, 0
    %p117 = por %p115, %p116
    %p118 = scmp.ne.s32.totalorder %s104, %s105
    %p119 = scmp.eq.s32.totalorder %s21, 15
    %p120 = por %p118, %p119
    %p122 = scmp.ne.s32.totalorder %s105, %s121
    %p123 = scmp.eq.s32.totalorder %s21, 0
    %p124 = por %p122, %p123
    %p125 = scmp.le.s32.totalorder 1, %s15
    %p126 = scmp.lt.s32.totalorder %s15, 17
    %p127 = pnand %p125, %p126
    %p128 = pneg %p127
    // Predicated region
    $region9: #{tpu_custom_call.1} parent=5 // pred_check
      _
    $region10: #{tpu_custom_call.1} parent=5 // pred_check_branch
      %130 = sbr.rel (%p127) target = $region12
    $region11: #{tpu_custom_call.1} parent=5 // pred_region
      %s131 = ssub.s32 %s15, 1
    $region12: #{tpu_custom_call.1} parent=5 // pred_fallthru
      _
    %p132 = scmp.lt.s32.totalorder %s15, 16
    // Predicated region
    $region13: #{tpu_custom_call.1} parent=5 // pred_check
      %p133 = pneg %p132
    $region14: #{tpu_custom_call.1} parent=5 // pred_check_branch
      %135 = sbr.rel (%p133) target = $region16
    $region15: #{tpu_custom_call.1} parent=5 // pred_region
      // Predicated region
      $region17: #{tpu_custom_call.1} parent=15 // pred_check
        %p136 = pneg %p47
      $region18: #{tpu_custom_call.1} parent=15 // pred_check_branch
        %138 = sbr.rel (%p136) target = $region20
      $region19: #{tpu_custom_call.1} parent=15 // pred_region
        %s139 = smul.u32 %s15, 128
        %s140 = sld [smem:[#allocation3 + %s139]]
        %s141 = smul.u32 %s140, 64
        %s142 = sadd.s32 %s139, 2
        %s143 = sld [smem:[#allocation3 + %s142]]
        %s144 = sadd.s32 %s141, %s143
        %p145 = scmp.lt.s32.totalorder %s144, 127
        %s146 = scalar_select %p145, %s144, 127
        %s147 = scalar_lea.vmem %s1, %s146
        %s148 = smul.u32 %s15, 128
        %s149 = sld [smem:[#allocation3 + %s148]]
        %s150 = smul.u32 %s149, 64
        %s151 = sadd.s32 %s148, 2
        %s152 = sld [smem:[#allocation3 + %s151]]
        %s153 = sadd.s32 %s150, %s152
      $region20: #{tpu_custom_call.1} parent=15 // pred_fallthru
        _
      // Predicated region
      $region21: #{tpu_custom_call.1} parent=15 // pred_check
        %p154 = pneg %p85
      $region22: #{tpu_custom_call.1} parent=15 // pred_check_branch
        %156 = sbr.rel (%p154) target = $region24
      $region23: #{tpu_custom_call.1} parent=15 // pred_region
        %s157 = smul.u32 %s15, 128
        %s158 = sld [smem:[#allocation3 + %s157]]
        %s159 = smul.u32 %s158, 64
        %s160 = sadd.s32 %s157, 2
        %s161 = sld [smem:[#allocation3 + %s160]]
        %s162 = sadd.s32 %s159, %s161
        %p163 = scmp.lt.s32.totalorder %s162, 127
        %s164 = scalar_select %p163, %s162, 127
        %s165 = scalar_lea.vmem %s2, %s164
        %s166 = smul.u32 %s15, 128
        %s167 = sld [smem:[#allocation3 + %s166]]
        %s168 = smul.u32 %s167, 64
        %s169 = sadd.s32 %s166, 2
        %s170 = sld [smem:[#allocation3 + %s169]]
        %s171 = sadd.s32 %s168, %s170
      $region24: #{tpu_custom_call.1} parent=15 // pred_fallthru
        _
    $region16: #{tpu_custom_call.1} parent=5 // pred_fallthru
      _
    %p172 = scmp.le.s32.totalorder 1, %s15
    %p173 = scmp.lt.s32.totalorder %s15, 17
    %p174 = pnand %p172, %p173
    %p175 = pneg %p174
    // Predicated region
    $region25: #{tpu_custom_call.1} parent=5 // pred_check
      _
    $region26: #{tpu_custom_call.1} parent=5 // pred_check_branch
      %177 = sbr.rel (%p174) target = $region28
    $region27: #{tpu_custom_call.1} parent=5 // pred_region
      %s178 = ssub.s32 %s15, 1
      %s179 = smul.u32 %s20, 128
      %s180 = sld [smem:[#allocation3 + %s179]]
      %s181 = smul.u32 %s180, 64
      %s182 = sadd.s32 %s179, 2
      %s183 = sld [smem:[#allocation3 + %s182]]
      %s184 = sadd.s32 %s181, %s183
      %p185 = scmp.lt.s32.totalorder %s184, 127
      %s186 = scalar_select %p185, %s184, 127
      %s187 = scalar_lea.vmem %s1, %s186
      %p188 = pneg %p53
      %p189 = pneg %p50
      %s190 = smul.u32 %s20, 128
      %s191 = sld [smem:[#allocation3 + %s190]]
      %s192 = smul.u32 %s191, 64
      %s193 = sadd.s32 %s190, 2
      %s194 = sld [smem:[#allocation3 + %s193]]
      %s195 = sadd.s32 %s192, %s194
      %p196 = scmp.lt.s32.totalorder %s195, 127
      %s197 = scalar_select %p196, %s195, 127
      %s198 = scalar_lea.vmem %s2, %s197
      %p199 = pneg %p91
      %p200 = pneg %p88
      %p201 = pneg %p117
      %p202 = pneg %p114
      %p203 = scmp.lt.s32.totalorder %s20, 15
      %s204 = scalar_select %p203, %s20, 15
      %s205 = scalar_lea.vmem %s3, %s204
      %s206 = smul.u32 %s20, 128
      %s207 = sld [smem:[#allocation3 + %s206]]
      %s208 = smul.u32 %s207, 64
      %s209 = sadd.s32 %s206, 2
      %s210 = sld [smem:[#allocation3 + %s209]]
      %s211 = sadd.s32 %s208, %s210
      %p212 = scmp.lt.s32.totalorder %s211, 127
      %s213 = scalar_select %p212, %s211, 127
      %s214 = scalar_lea.vmem %s1, %s213
      %s215 = smul.u32 %s20, 128
      %s216 = sld [smem:[#allocation3 + %s215]]
      %s217 = smul.u32 %s216, 64
      %s218 = sadd.s32 %s215, 2
      %s219 = sld [smem:[#allocation3 + %s218]]
      %s220 = sadd.s32 %s217, %s219
      %s221 = smul.u32 %s20, 128
      %s222 = sld [smem:[#allocation3 + %s221]]
      %s223 = smul.u32 %s222, 64
      %s224 = sadd.s32 %s221, 2
      %s225 = sld [smem:[#allocation3 + %s224]]
      %s226 = sadd.s32 %s223, %s225
      %p227 = scmp.lt.s32.totalorder %s226, 127
      %s228 = scalar_select %p227, %s226, 127
      %s229 = scalar_lea.vmem %s2, %s228
      %s230 = smul.u32 %s20, 128
      %s231 = sld [smem:[#allocation3 + %s230]]
      %s232 = smul.u32 %s231, 64
      %s233 = sadd.s32 %s230, 2
      %s234 = sld [smem:[#allocation3 + %s233]]
      %s235 = sadd.s32 %s232, %s234
      %p236 = scmp.lt.s32.totalorder %s20, 15
      %s237 = scalar_select %p236, %s20, 15
      %s238 = scalar_lea.vmem %s3, %s237
      %s239 = smul.u32 %s20, 128
      %s240 = sld [smem:[#allocation3 + %s239]]
      %s241 = sadd.s32 %s239, 1
      %s242 = sld [smem:[#allocation3 + %s241]]
      %v243 = vld [vmem:[%s214] sm:$0x1]
      %v244 = vld [vmem:[%s229] sm:$0x1]
      %v245 = vlaneseq
      %v246 = vand.u32 %v245, 127
      %v247 = vstv %s242
      %vm248 = vcmp.eq.s32.totalorder %v246, %v247
      %v249 = vsel %vm248, %v244, 0.0
      %vm250 = vcmask 122880
      %v251 = vsel %vm250, %v249, 0.0
      %252 = vadd.xlane.f32.xlu0 %v251
      %v253 = vpop.xlane.xlu0 %252
      %s254 = scvt.s32.f32 %s240
      %v255 = vstv %s254
      %s256 = scvt.s32.f32 %s242
      %v257 = vstv %s256
      %v259 = vlaneseq
      %v260 = vshrl.u32 %v259, 7
      %v261 = vsub.s32 0, %v260
      %v262 = vrot.slane %v243, %v261
      %263 = vrot.lane.b32.xlu0 %v262, 1
      %v264 = vpop.permute.xlu0 %263
      %vm266 = vcmask 7168
      %v267 = vsel %vm266, %v255, %v264
      %vm268 = vcmask 39936
      %v269 = vsel %vm268, %v267, %v253
      %vm270 = vcmask 48128
      %v271 = vsel %vm270, %v269, %v257
      %vm272 = vcmask 49152
      %273 = vst.msk [vmem:[%s238] sm:$0x1] %vm272, %v271
      %p274 = scmp.lt.s32.totalorder %s20, 15
      %s275 = scalar_select %p274, %s20, 15
      %s276 = scalar_lea.vmem %s3, %s275
      // Predicated region
      $region29: #{tpu_custom_call.1} parent=27 // pred_check
        %p277 = pneg %p114
      $region30: #{tpu_custom_call.1} parent=27 // pred_check_branch
        %279 = sbr.rel (%p277) target = $region32
      $region31: #{tpu_custom_call.1} parent=27 // pred_region
        _
      $region32: #{tpu_custom_call.1} parent=27 // pred_fallthru
        _
    $region28: #{tpu_custom_call.1} parent=5 // pred_fallthru
      _
    %p280 = scmp.le.s32.totalorder 2, %s15
    // Predicated region
    $region33: #{tpu_custom_call.1} parent=5 // pred_check
      %p281 = pneg %p280
    $region34: #{tpu_custom_call.1} parent=5 // pred_check_branch
      %283 = sbr.rel (%p281) target = $region36
    $region35: #{tpu_custom_call.1} parent=5 // pred_region
      %s284 = ssub.s32 %s15, 2
      // Predicated region
      $region37: #{tpu_custom_call.1} parent=35 // pred_check
        %p285 = pneg %p120
      $region38: #{tpu_custom_call.1} parent=35 // pred_check_branch
        %287 = sbr.rel (%p285) target = $region40
      $region39: #{tpu_custom_call.1} parent=35 // pred_region
        %p288 = scmp.lt.s32.totalorder %s21, 15
        %s289 = scalar_select %p288, %s21, 15
        %s290 = scalar_lea.vmem %s3, %s289
      $region40: #{tpu_custom_call.1} parent=35 // pred_fallthru
        _
    $region36: #{tpu_custom_call.1} parent=5 // pred_fallthru
      _
  $region6: #{tpu_custom_call.1} parent=0 // loop_footer
    %s19 = sadd.s32 1, %s15
  $region7: #{tpu_custom_call.1} parent=0 // loop_footer_branch
    %14 = sbr.rel target = $region3
  $region8: #{tpu_custom_call.1} parent=0 // loop_exit
    _

</llo_original>
